<compile_context>
chip_gen: v7x
topology: tpu7x:2x2x1
jax: 0.10.0
libtpu: 0.0.40
codegen_flags: <defaults>
</compile_context>

<pallas_src>
import jax
import jax.numpy as jnp
from jax.experimental import pallas as pl
from jax.experimental.pallas import tpu as pltpu


# ----------------------------------------------------------------------------
# Pallas kernels
# ----------------------------------------------------------------------------

def _downblock_kernel(p_ref, w_ref, gb_ref, o_ref):
    # Fused Conv2DSN(4,2,1) [as im2col matmul] + BatchNorm2d (train-mode batch
    # stats) + LeakyReLU(0.2).
    # p: (M, K) patches, w: (K, N), gb: (2, N) = [gamma; beta], o: (M, N)
    # M = B*OH*OW.  Conv bias omitted: it cancels exactly under the BN mean
    # subtraction (train mode), so the block output is identical without it.
    y = jnp.dot(p_ref[...], w_ref[...], preferred_element_type=jnp.float32)
    mean = jnp.mean(y, axis=0, keepdims=True)
    var = jnp.mean((y - mean) ** 2, axis=0, keepdims=True)
    gb = gb_ref[...]
    scale = gb[0:1, :] * jax.lax.rsqrt(var + 1e-5)    # fold gamma into the (1,N) scale
    z = (y - mean) * scale + gb[1:2, :]
    o_ref[...] = jnp.where(z >= 0, z, 0.2 * z)


def _mbstd_final_kernel(x_ref, w_ref, s_ref, o_ref):
    # Fused MinibatchStdLayer + final Conv2DSN(kernel=4, stride=1, pad=0) for
    # the case where the remaining spatial extent equals the kernel (4x4 -> 1x1).
    # x: (B, H*W*C) NHWC-flattened activation, w: (H*W*C, 1) weight for the real
    # channels, s (SMEM, (2,)): [sum of final weight over the mbstd channel, bias].
    x = x_ref[...]
    B = x.shape[0]
    mean = jnp.mean(x, axis=0, keepdims=True)
    var = jnp.sum((x - mean) ** 2, axis=0, keepdims=True) / (B - 1)  # unbiased (torch.std)
    ms = jnp.mean(jnp.sqrt(var))                                     # mbstd scalar (no eps, like torch)
    y = jnp.dot(x, w_ref[...], preferred_element_type=jnp.float32)   # (B, 1)
    o_ref[...] = y + ms * s_ref[0] + s_ref[1]


# ----------------------------------------------------------------------------
# Pallas wrappers (single grid point, full-array blocks: everything fits VMEM)
# ----------------------------------------------------------------------------

_ARB = pltpu.CompilerParams(dimension_semantics=("arbitrary",))


def downblock_fused(patches, w_mat, gamma_beta):
    M, K = patches.shape
    N = w_mat.shape[1]
    return pl.pallas_call(
        _downblock_kernel,
        out_shape=jax.ShapeDtypeStruct((M, N), jnp.float32),
        grid=(1,),
        in_specs=[
            pl.BlockSpec((M, K), lambda i: (0, 0)),
            pl.BlockSpec((K, N), lambda i: (0, 0)),
            pl.BlockSpec((2, N), lambda i: (0, 0)),
        ],
        out_specs=pl.BlockSpec((M, N), lambda i: (0, 0)),
        compiler_params=_ARB,
    )(patches, w_mat, gamma_beta)


def mbstd_final_conv(x_flat, w_main, scalars):
    B, K = x_flat.shape
    return pl.pallas_call(
        _mbstd_final_kernel,
        out_shape=jax.ShapeDtypeStruct((B, 1), jnp.float32),
        grid=(1,),
        in_specs=[
            pl.BlockSpec((B, K), lambda i: (0, 0)),
            pl.BlockSpec((K, 1), lambda i: (0, 0)),
            pl.BlockSpec(memory_space=pltpu.MemorySpace.SMEM),
        ],
        out_specs=pl.BlockSpec((B, 1), lambda i: (0, 0)),
        compiler_params=_ARB,
    )(x_flat, w_main, scalars)


# ----------------------------------------------------------------------------
# Glue: NHWC im2col (slices + concat only, no transposes), parameter setup
# ----------------------------------------------------------------------------

def im2col_nhwc(x, k, stride, pad):
    # x: (B, H, W, C) -> patches (B*OH*OW, k*k*C) in (kh, kw, c) flat order,
    # matching the weight reorder done in init_params.
    B, H, W, C = x.shape
    if pad:
        x = jnp.pad(x, ((0, 0), (pad, pad), (pad, pad), (0, 0)))
    Hp, Wp = H + 2 * pad, W + 2 * pad
    OH = (Hp - k) // stride + 1
    OW = (Wp - k) // stride + 1
    cols = [
        x[:, kh:kh + stride * OH:stride, kw:kw + stride * OW:stride, :]
        for kh in range(k) for kw in range(k)
    ]
    patches = jnp.concatenate(cols, axis=-1)           # (B, OH, OW, k*k*C)
    return patches.reshape(B * OH * OW, k * k * C), OH, OW


def spectral_normalize(w, key, n_iter=1):
    # Conv2DSN ~= spectral_norm(nn.Conv2d(...)); deterministic u, 1 power iteration.
    out_ch = w.shape[0]
    w_mat = w.reshape(out_ch, -1)
    u = jax.random.normal(key, (out_ch,), jnp.float32)
    u = u / (jnp.linalg.norm(u) + 1e-12)
    v = jnp.zeros((w_mat.shape[1],), jnp.float32)
    for _ in range(n_iter):
        v = w_mat.T @ u
        v = v / (jnp.linalg.norm(v) + 1e-12)
        u = w_mat @ v
        u = u / (jnp.linalg.norm(u) + 1e-12)
    sigma = u @ (w_mat @ v)
    return w / sigma


def init_params(key, in_channels, levels):
    # Pad the first layer's input channels so K = 16*C is a multiple of 128
    # (zero weight rows -> identical conv result, aligned MXU operands).
    in_ch_pad = (-in_channels) % 8
    params = {"in_ch_pad": in_ch_pad, "blocks": []}
    c_in = in_channels
    pad_now = in_ch_pad
    for out_ch in levels:
        key, kw_, kb_, ku_ = jax.random.split(key, 4)
        w = jax.random.normal(kw_, (out_ch, c_in, 4, 4), jnp.float32) * 0.1
        w = spectral_normalize(w, ku_)
        if pad_now:
            w = jnp.pad(w, ((0, 0), (0, pad_now), (0, 0), (0, 0)))
        # The conv bias (kb_) exists in the torch module but is exactly
        # cancelled by the train-mode BatchNorm mean subtraction -> not used.
        _ = jax.random.normal(kb_, (out_ch,), jnp.float32) * 0.1
        gamma = jnp.ones((out_ch,), jnp.float32)        # BatchNorm2d default init
        beta = jnp.zeros((out_ch,), jnp.float32)
        params["blocks"].append({
            # (out, c, kh, kw) -> (kh, kw, c, out) -> (16*C_pad, out): matches
            # the (kh, kw, c) flat order produced by im2col_nhwc.
            "w_mat": jnp.transpose(w, (2, 3, 1, 0)).reshape(-1, out_ch),
            "gb": jnp.stack([gamma, beta], axis=0),     # (2, out_ch) single operand
        })
        c_in = out_ch
        pad_now = 0   # intermediate channel counts come straight from the kernels

    # Final Conv2DSN(in=C+1, out=1, kernel=4, stride=1, pad=0)
    key, kw_, kb_, ku_ = jax.random.split(key, 4)
    w = jax.random.normal(kw_, (1, c_in + 1, 4, 4), jnp.float32) * 0.1
    w = spectral_normalize(w, ku_)
    b = jax.random.normal(kb_, (1,), jnp.float32) * 0.1
    w_main = jnp.transpose(w[:, :c_in], (2, 3, 1, 0)).reshape(-1, 1)   # (16*C, 1), (h,w,c) order
    w_extra_sum = jnp.sum(w[:, c_in])                                  # mbstd channel weight sum
    params["final_w_main"] = w_main.astype(jnp.float32)
    params["final_scalars"] = jnp.stack([w_extra_sum, b[0]]).astype(jnp.float32)  # (2,) -> SMEM
    return params


def discriminator_forward(x_nchw, params):
    # NCHW -> NHWC once at the boundary; everything downstream stays NHWC.
    x = jnp.transpose(x_nchw.astype(jnp.float32), (0, 2, 3, 1))
    B = x.shape[0]
    if params["in_ch_pad"]:
        x = jnp.pad(x, ((0, 0), (0, 0), (0, 0), (0, params["in_ch_pad"])))

    # DownBlocks: fused Conv2DSN(4,2,1) + BatchNorm2d + LeakyReLU(0.2)
    for p in params["blocks"]:
        patches, OH, OW = im2col_nhwc(x, k=4, stride=2, pad=1)
        out_ch = p["w_mat"].shape[1]
        y = downblock_fused(patches, p["w_mat"], p["gb"])
        x = y.reshape(B, OH, OW, out_ch)        # still NHWC, no transpose

    # Fused MinibatchStdLayer + final conv (4x4 spatial -> 1x1 output).
    _, H, W, C = x.shape
    assert (H, W) == (4, 4), f"final Conv2DSN(4,1,0) expects 4x4 spatial, got {(H, W)}"
    x_flat = x.reshape(B, H * W * C)
    out = mbstd_final_conv(x_flat, params["final_w_main"], params["final_scalars"])  # (B, 1)
    return out.reshape(B, 1, 1, 1)              # NCHW (B, 1, 1, 1)


if __name__ == "__main__":
    key = jax.random.PRNGKey(0)
    kx, kp = jax.random.split(key)

    in_channels = 4
    levels = [8, 16]
    x = jax.random.normal(kx, (2, in_channels, 16, 16), jnp.float32)

    params = init_params(kp, in_channels, levels)

    fwd = jax.jit(lambda inp: discriminator_forward(inp, params))
    out = jax.block_until_ready(fwd(x))

    assert out.shape == (2, 1, 1, 1), out.shape
    assert bool(jnp.all(jnp.isfinite(out)))
    print("KERNEL_OK")
</pallas_src>

<mosaic_0001>
module attributes {stable_mosaic.version = 11 : i64} {
  func.func @_downblock_kernel(%arg0: i32, %arg1: memref<128x128xf32, #tpu.memory_space<vmem>>, %arg2: memref<128x8xf32, #tpu.memory_space<vmem>>, %arg3: memref<2x8xf32, #tpu.memory_space<vmem>>, %arg4: memref<128x8xf32, #tpu.memory_space<vmem>>) attributes {dimension_semantics = [#tpu.dimension_semantics<arbitrary>], iteration_bounds = array<i64: 1>, scalar_prefetch = 0 : i64, scratch_operands = 0 : i64, tpu.core_type = #tpu.core_type<tc>, window_params = [{pipeline_mode = #tpu.pipeline_mode<synchronous>, transform_indices = @transform_0, window_bounds = array<i64: 128, 128>}, {pipeline_mode = #tpu.pipeline_mode<synchronous>, transform_indices = @transform_1, window_bounds = array<i64: 128, 8>}, {pipeline_mode = #tpu.pipeline_mode<synchronous>, transform_indices = @transform_2, window_bounds = array<i64: 2, 8>}, {pipeline_mode = #tpu.pipeline_mode<synchronous>, transform_indices = @transform_3, window_bounds = array<i64: 128, 8>}]} {
    %c0 = arith.constant 0 : index
    %c0_0 = arith.constant 0 : index
    %0 = vector.load %arg1[%c0, %c0_0] : memref<128x128xf32, #tpu.memory_space<vmem>>, vector<128x128xf32>
    %c0_1 = arith.constant 0 : index
    %c0_2 = arith.constant 0 : index
    %1 = vector.load %arg2[%c0_1, %c0_2] : memref<128x8xf32, #tpu.memory_space<vmem>>, vector<128x8xf32>
    %cst = arith.constant dense<0.000000e+00> : vector<128x8xf32>
    %2 = tpu.matmul %0, %1, %cst {dimension_numbers = #tpu.dot_dimension_numbers<[1], [0], [0], [1], [0, 0, 1, 1], [], []>} : vector<128x128xf32>, vector<128x8xf32>, vector<128x8xf32> -> vector<128x8xf32>
    %cst_3 = arith.constant dense<0.000000e+00> : vector<8xf32>
    %3 = vector.multi_reduction <add>, %2, %cst_3 [0] : vector<128x8xf32> to vector<8xf32>
    %4 = vector.shape_cast %3 : vector<8xf32> to vector<1x8xf32>
    %cst_4 = arith.constant 1.280000e+02 : f32
    %5 = vector.broadcast %cst_4 : f32 to vector<1x8xf32>
    %6 = arith.divf %4, %5 : vector<1x8xf32>
    %7 = vector.broadcast %6 : vector<1x8xf32> to vector<128x8xf32>
    %8 = arith.subf %2, %7 : vector<128x8xf32>
    %9 = arith.mulf %8, %8 : vector<128x8xf32>
    %cst_5 = arith.constant dense<0.000000e+00> : vector<8xf32>
    %10 = vector.multi_reduction <add>, %9, %cst_5 [0] : vector<128x8xf32> to vector<8xf32>
    %11 = vector.shape_cast %10 : vector<8xf32> to vector<1x8xf32>
    %cst_6 = arith.constant 1.280000e+02 : f32
    %12 = vector.broadcast %cst_6 : f32 to vector<1x8xf32>
    %13 = arith.divf %11, %12 : vector<1x8xf32>
    %c0_7 = arith.constant 0 : index
    %c0_8 = arith.constant 0 : index
    %14 = vector.load %arg3[%c0_7, %c0_8] : memref<2x8xf32, #tpu.memory_space<vmem>>, vector<2x8xf32>
    %15 = vector.extract_strided_slice %14 {offsets = [0, 0], sizes = [1, 8], strides = [1, 1]} : vector<2x8xf32> to vector<1x8xf32>
    %cst_9 = arith.constant 9.99999974E-6 : f32
    %16 = vector.broadcast %cst_9 : f32 to vector<1x8xf32>
    %17 = arith.addf %13, %16 : vector<1x8xf32>
    %18 = math.rsqrt %17 : vector<1x8xf32>
    %19 = arith.mulf %15, %18 : vector<1x8xf32>
    %20 = vector.broadcast %6 : vector<1x8xf32> to vector<128x8xf32>
    %21 = arith.subf %2, %20 : vector<128x8xf32>
    %22 = vector.broadcast %19 : vector<1x8xf32> to vector<128x8xf32>
    %23 = arith.mulf %21, %22 : vector<128x8xf32>
    %24 = vector.extract_strided_slice %14 {offsets = [1, 0], sizes = [1, 8], strides = [1, 1]} : vector<2x8xf32> to vector<1x8xf32>
    %25 = vector.broadcast %24 : vector<1x8xf32> to vector<128x8xf32>
    %26 = arith.addf %23, %25 : vector<128x8xf32>
    %cst_10 = arith.constant 0.000000e+00 : f32
    %27 = vector.broadcast %cst_10 : f32 to vector<128x8xf32>
    %28 = arith.cmpf oge, %26, %27 : vector<128x8xf32>
    %cst_11 = arith.constant 2.000000e-01 : f32
    %29 = vector.broadcast %cst_11 : f32 to vector<128x8xf32>
    %30 = arith.mulf %29, %26 : vector<128x8xf32>
    %31 = arith.select %28, %26, %30 : vector<128x8xi1>, vector<128x8xf32>
    %c0_12 = arith.constant 0 : index
    %c0_13 = arith.constant 0 : index
    %32 = vector.load %arg4[%c0_12, %c0_13] : memref<128x8xf32, #tpu.memory_space<vmem>>, vector<128x8xf32>
    tpu.vector_store %arg4[%c0_12, %c0_13], %31 {strides = array<i32>} : memref<128x8xf32, #tpu.memory_space<vmem>>, vector<128x8xf32>,
    return
  }
  func.func @transform_0(%arg0: i32) -> (i32, i32) {
    %c0_i32 = arith.constant 0 : i32
    %c0_i32_0 = arith.constant 0 : i32
    %c0_i32_1 = arith.constant 0 : i32
    return %c0_i32, %c0_i32_0 : i32, i32
  }
  func.func @transform_1(%arg0: i32) -> (i32, i32) {
    %c0_i32 = arith.constant 0 : i32
    %c0_i32_0 = arith.constant 0 : i32
    %c0_i32_1 = arith.constant 0 : i32
    return %c0_i32, %c0_i32_0 : i32, i32
  }
  func.func @transform_2(%arg0: i32) -> (i32, i32) {
    %c0_i32 = arith.constant 0 : i32
    %c0_i32_0 = arith.constant 0 : i32
    %c0_i32_1 = arith.constant 0 : i32
    return %c0_i32, %c0_i32_0 : i32, i32
  }
  func.func @transform_3(%arg0: i32) -> (i32, i32) {
    %c0_i32 = arith.constant 0 : i32
    %c0_i32_0 = arith.constant 0 : i32
    %c0_i32_1 = arith.constant 0 : i32
    return %c0_i32, %c0_i32_0 : i32, i32
  }
}

module attributes {stable_mosaic.version = 11 : i64} {
  func.func @_downblock_kernel(%arg0: i32, %arg1: memref<32x128xf32, #tpu.memory_space<vmem>>, %arg2: memref<128x16xf32, #tpu.memory_space<vmem>>, %arg3: memref<2x16xf32, #tpu.memory_space<vmem>>, %arg4: memref<32x16xf32, #tpu.memory_space<vmem>>) attributes {dimension_semantics = [#tpu.dimension_semantics<arbitrary>], iteration_bounds = array<i64: 1>, scalar_prefetch = 0 : i64, scratch_operands = 0 : i64, tpu.core_type = #tpu.core_type<tc>, window_params = [{pipeline_mode = #tpu.pipeline_mode<synchronous>, transform_indices = @transform_0, window_bounds = array<i64: 32, 128>}, {pipeline_mode = #tpu.pipeline_mode<synchronous>, transform_indices = @transform_1, window_bounds = array<i64: 128, 16>}, {pipeline_mode = #tpu.pipeline_mode<synchronous>, transform_indices = @transform_2, window_bounds = array<i64: 2, 16>}, {pipeline_mode = #tpu.pipeline_mode<synchronous>, transform_indices = @transform_3, window_bounds = array<i64: 32, 16>}]} {
    %c0 = arith.constant 0 : index
    %c0_0 = arith.constant 0 : index
    %0 = vector.load %arg1[%c0, %c0_0] : memref<32x128xf32, #tpu.memory_space<vmem>>, vector<32x128xf32>
    %c0_1 = arith.constant 0 : index
    %c0_2 = arith.constant 0 : index
    %1 = vector.load %arg2[%c0_1, %c0_2] : memref<128x16xf32, #tpu.memory_space<vmem>>, vector<128x16xf32>
    %cst = arith.constant dense<0.000000e+00> : vector<32x16xf32>
    %2 = tpu.matmul %0, %1, %cst {dimension_numbers = #tpu.dot_dimension_numbers<[1], [0], [0], [1], [0, 0, 1, 1], [], []>} : vector<32x128xf32>, vector<128x16xf32>, vector<32x16xf32> -> vector<32x16xf32>
    %cst_3 = arith.constant dense<0.000000e+00> : vector<16xf32>
    %3 = vector.multi_reduction <add>, %2, %cst_3 [0] : vector<32x16xf32> to vector<16xf32>
    %4 = vector.shape_cast %3 : vector<16xf32> to vector<1x16xf32>
    %cst_4 = arith.constant 3.200000e+01 : f32
    %5 = vector.broadcast %cst_4 : f32 to vector<1x16xf32>
    %6 = arith.divf %4, %5 : vector<1x16xf32>
    %7 = vector.broadcast %6 : vector<1x16xf32> to vector<32x16xf32>
    %8 = arith.subf %2, %7 : vector<32x16xf32>
    %9 = arith.mulf %8, %8 : vector<32x16xf32>
    %cst_5 = arith.constant dense<0.000000e+00> : vector<16xf32>
    %10 = vector.multi_reduction <add>, %9, %cst_5 [0] : vector<32x16xf32> to vector<16xf32>
    %11 = vector.shape_cast %10 : vector<16xf32> to vector<1x16xf32>
    %cst_6 = arith.constant 3.200000e+01 : f32
    %12 = vector.broadcast %cst_6 : f32 to vector<1x16xf32>
    %13 = arith.divf %11, %12 : vector<1x16xf32>
    %c0_7 = arith.constant 0 : index
    %c0_8 = arith.constant 0 : index
    %14 = vector.load %arg3[%c0_7, %c0_8] : memref<2x16xf32, #tpu.memory_space<vmem>>, vector<2x16xf32>
    %15 = vector.extract_strided_slice %14 {offsets = [0, 0], sizes = [1, 16], strides = [1, 1]} : vector<2x16xf32> to vector<1x16xf32>
    %cst_9 = arith.constant 9.99999974E-6 : f32
    %16 = vector.broadcast %cst_9 : f32 to vector<1x16xf32>
    %17 = arith.addf %13, %16 : vector<1x16xf32>
    %18 = math.rsqrt %17 : vector<1x16xf32>
    %19 = arith.mulf %15, %18 : vector<1x16xf32>
    %20 = vector.broadcast %6 : vector<1x16xf32> to vector<32x16xf32>
    %21 = arith.subf %2, %20 : vector<32x16xf32>
    %22 = vector.broadcast %19 : vector<1x16xf32> to vector<32x16xf32>
    %23 = arith.mulf %21, %22 : vector<32x16xf32>
    %24 = vector.extract_strided_slice %14 {offsets = [1, 0], sizes = [1, 16], strides = [1, 1]} : vector<2x16xf32> to vector<1x16xf32>
    %25 = vector.broadcast %24 : vector<1x16xf32> to vector<32x16xf32>
    %26 = arith.addf %23, %25 : vector<32x16xf32>
    %cst_10 = arith.constant 0.000000e+00 : f32
    %27 = vector.broadcast %cst_10 : f32 to vector<32x16xf32>
    %28 = arith.cmpf oge, %26, %27 : vector<32x16xf32>
    %cst_11 = arith.constant 2.000000e-01 : f32
    %29 = vector.broadcast %cst_11 : f32 to vector<32x16xf32>
    %30 = arith.mulf %29, %26 : vector<32x16xf32>
    %31 = arith.select %28, %26, %30 : vector<32x16xi1>, vector<32x16xf32>
    %c0_12 = arith.constant 0 : index
    %c0_13 = arith.constant 0 : index
    %32 = vector.load %arg4[%c0_12, %c0_13] : memref<32x16xf32, #tpu.memory_space<vmem>>, vector<32x16xf32>
    tpu.vector_store %arg4[%c0_12, %c0_13], %31 {strides = array<i32>} : memref<32x16xf32, #tpu.memory_space<vmem>>, vector<32x16xf32>,
    return
  }
  func.func @transform_0(%arg0: i32) -> (i32, i32) {
    %c0_i32 = arith.constant 0 : i32
    %c0_i32_0 = arith.constant 0 : i32
    %c0_i32_1 = arith.constant 0 : i32
    return %c0_i32, %c0_i32_0 : i32, i32
  }
  func.func @transform_1(%arg0: i32) -> (i32, i32) {
    %c0_i32 = arith.constant 0 : i32
    %c0_i32_0 = arith.constant 0 : i32
    %c0_i32_1 = arith.constant 0 : i32
    return %c0_i32, %c0_i32_0 : i32, i32
  }
  func.func @transform_2(%arg0: i32) -> (i32, i32) {
    %c0_i32 = arith.constant 0 : i32
    %c0_i32_0 = arith.constant 0 : i32
    %c0_i32_1 = arith.constant 0 : i32
    return %c0_i32, %c0_i32_0 : i32, i32
  }
  func.func @transform_3(%arg0: i32) -> (i32, i32) {
    %c0_i32 = arith.constant 0 : i32
    %c0_i32_0 = arith.constant 0 : i32
    %c0_i32_1 = arith.constant 0 : i32
    return %c0_i32, %c0_i32_0 : i32, i32
  }
}

module attributes {stable_mosaic.version = 11 : i64} {
  func.func @_mbstd_final_kernel(%arg0: i32, %arg1: memref<2x256xf32, #tpu.memory_space<vmem>>, %arg2: memref<256x1xf32, #tpu.memory_space<vmem>>, %arg3: memref<2xf32, #tpu.memory_space<smem>>, %arg4: memref<2x1xf32, #tpu.memory_space<vmem>>) attributes {dimension_semantics = [#tpu.dimension_semantics<arbitrary>], iteration_bounds = array<i64: 1>, scalar_prefetch = 0 : i64, scratch_operands = 0 : i64, tpu.core_type = #tpu.core_type<tc>, window_params = [{pipeline_mode = #tpu.pipeline_mode<synchronous>, transform_indices = @transform_0, window_bounds = array<i64: 2, 256>}, {pipeline_mode = #tpu.pipeline_mode<synchronous>, transform_indices = @transform_1, window_bounds = array<i64: 256, 1>}, {transform_indices = @transform_2, window_bounds = array<i64: 2>}, {pipeline_mode = #tpu.pipeline_mode<synchronous>, transform_indices = @transform_3, window_bounds = array<i64: 2, 1>}]} {
    %c0 = arith.constant 0 : index
    %c0_0 = arith.constant 0 : index
    %0 = vector.load %arg1[%c0, %c0_0] : memref<2x256xf32, #tpu.memory_space<vmem>>, vector<2x256xf32>
    %cst = arith.constant dense<0.000000e+00> : vector<256xf32>
    %1 = vector.multi_reduction <add>, %0, %cst [0] : vector<2x256xf32> to vector<256xf32>
    %2 = vector.shape_cast %1 : vector<256xf32> to vector<1x256xf32>
    %cst_1 = arith.constant 2.000000e+00 : f32
    %3 = vector.broadcast %cst_1 : f32 to vector<1x256xf32>
    %4 = arith.divf %2, %3 : vector<1x256xf32>
    %5 = vector.broadcast %4 : vector<1x256xf32> to vector<2x256xf32>
    %6 = arith.subf %0, %5 : vector<2x256xf32>
    %7 = arith.mulf %6, %6 : vector<2x256xf32>
    %cst_2 = arith.constant dense<0.000000e+00> : vector<256xf32>
    %8 = vector.multi_reduction <add>, %7, %cst_2 [0] : vector<2x256xf32> to vector<256xf32>
    %9 = vector.shape_cast %8 : vector<256xf32> to vector<1x256xf32>
    %cst_3 = arith.constant 1.000000e+00 : f32
    %10 = vector.broadcast %cst_3 : f32 to vector<1x256xf32>
    %11 = arith.divf %9, %10 : vector<1x256xf32>
    %12 = math.sqrt %11 : vector<1x256xf32>
    %13 = vector.shape_cast %12 : vector<1x256xf32> to vector<1x1x256xf32>
    %cst_4 = arith.constant dense<0.000000e+00> : vector<1xf32>
    %14 = vector.multi_reduction <add>, %13, %cst_4 [1, 2] : vector<1x1x256xf32> to vector<1xf32>
    %15 = vector.shape_cast %14 : vector<1xf32> to vector<1x1x1xf32>
    %16 = vector.extract %15[0, 0, 0] : f32 from vector<1x1x1xf32>
    %cst_5 = arith.constant 2.560000e+02 : f32
    %17 = arith.divf %16, %cst_5 : f32
    %c0_6 = arith.constant 0 : index
    %c0_7 = arith.constant 0 : index
    %18 = vector.load %arg2[%c0_6, %c0_7] : memref<256x1xf32, #tpu.memory_space<vmem>>, vector<256x1xf32>
    %cst_8 = arith.constant dense<0.000000e+00> : vector<2x1xf32>
    %19 = tpu.matmul %0, %18, %cst_8 {dimension_numbers = #tpu.dot_dimension_numbers<[1], [0], [0], [1], [0, 0, 1, 1], [], []>} : vector<2x256xf32>, vector<256x1xf32>, vector<2x1xf32> -> vector<2x1xf32>
    %c0_9 = arith.constant 0 : index
    %20 = memref.load %arg3[%c0_9] : memref<2xf32, #tpu.memory_space<smem>>
    %21 = arith.mulf %17, %20 : f32
    %22 = vector.broadcast %21 : f32 to vector<2x1xf32>
    %23 = arith.addf %19, %22 : vector<2x1xf32>
    %c1 = arith.constant 1 : index
    %24 = memref.load %arg3[%c1] : memref<2xf32, #tpu.memory_space<smem>>
    %25 = vector.broadcast %24 : f32 to vector<2x1xf32>
    %26 = arith.addf %23, %25 : vector<2x1xf32>
    %c0_10 = arith.constant 0 : index
    %c0_11 = arith.constant 0 : index
    %27 = vector.load %arg4[%c0_10, %c0_11] : memref<2x1xf32, #tpu.memory_space<vmem>>, vector<2x1xf32>
    tpu.vector_store %arg4[%c0_10, %c0_11], %26 {strides = array<i32>} : memref<2x1xf32, #tpu.memory_space<vmem>>, vector<2x1xf32>,
    return
  }
  func.func @transform_0(%arg0: i32) -> (i32, i32) {
    %c0_i32 = arith.constant 0 : i32
    %c0_i32_0 = arith.constant 0 : i32
    %c0_i32_1 = arith.constant 0 : i32
    return %c0_i32, %c0_i32_0 : i32, i32
  }
  func.func @transform_1(%arg0: i32) -> (i32, i32) {
    %c0_i32 = arith.constant 0 : i32
    %c0_i32_0 = arith.constant 0 : i32
    %c0_i32_1 = arith.constant 0 : i32
    return %c0_i32, %c0_i32_0 : i32, i32
  }
  func.func @transform_2(%arg0: i32) -> i32 {
    %c0_i32 = arith.constant 0 : i32
    %c0_i32_0 = arith.constant 0 : i32
    return %c0_i32 : i32
  }
  func.func @transform_3(%arg0: i32) -> (i32, i32) {
    %c0_i32 = arith.constant 0 : i32
    %c0_i32_0 = arith.constant 0 : i32
    %c0_i32_1 = arith.constant 0 : i32
    return %c0_i32, %c0_i32_0 : i32, i32
  }
}

</mosaic_0001>

<llo_original>
// kernel: _lambda_.3
$region0: #{_lambda_.3}
  #allocation0 [shape = 'u32[]', space=smem, size = 0x4, offset = 0x4, fixed_abs, tag = 'smem constant byte address 0x4 - core index']
  #allocation1 [shape = 'u32[144,128]{1,0:T(1,128)}', space=vmem, size = 0x12000, scoped, tag = 'internal scratch']
  %s0 = inlined_call_operand.vmem [shape: f32[128,128], index: 0, kind: input, shape index: {}]
  %s1 = inlined_call_operand.vmem [shape: f32[128,8], index: 1, kind: input, shape index: {}]
  %s2 = inlined_call_operand.vmem [shape: f32[2,8], index: 2, kind: input, shape index: {}]
  %s3 = inlined_call_operand.vmem [shape: f32[128,8], index: 3, kind: output, shape index: {}]
  %s4 = sld [smem:[#allocation0]]
  $region22: #{_lambda_.3} parent=0
    _
  %s6 = ssub.s32 1, %s4
  %s7 = scalar_select 0, %s6, %s4
  // Predicated region
  $region2: #{_lambda_.3} parent=0 // pred_check
    _
  $region3: #{_lambda_.3} parent=0 // pred_check_branch
    %9 = sbr.rel (0) target = $region5
  $region4: #{_lambda_.3} parent=0 // pred_region
    _
  $region5: #{_lambda_.3} parent=0 // pred_fallthru
    _
  // Predicated region
  $region6: #{_lambda_.3} parent=0 // pred_check
    _
  $region7: #{_lambda_.3} parent=0 // pred_check_branch
    %11 = sbr.rel (0) target = $region9
  $region8: #{_lambda_.3} parent=0 // pred_region
    _
  $region9: #{_lambda_.3} parent=0 // pred_fallthru
    _
  // Predicated region
  $region10: #{_lambda_.3} parent=0 // pred_check
    _
  $region11: #{_lambda_.3} parent=0 // pred_check_branch
    %13 = sbr.rel (0) target = $region13
  $region12: #{_lambda_.3} parent=0 // pred_region
    _
  $region13: #{_lambda_.3} parent=0 // pred_fallthru
    _
  %v14 = vld [vmem:[%s0] sm:$0xff]
  %v15 = vld [vmem:[%s0 + $0x8] sm:$0xff]
  %v16 = vld [vmem:[%s0 + $0x10] sm:$0xff]
  %v17 = vld [vmem:[%s0 + $0x18] sm:$0xff]
  %v18 = vld [vmem:[%s0 + $0x20] sm:$0xff]
  %v19 = vld [vmem:[%s0 + $0x28] sm:$0xff]
  %v20 = vld [vmem:[%s0 + $0x30] sm:$0xff]
  %v21 = vld [vmem:[%s0 + $0x38] sm:$0xff]
  %v22 = vld [vmem:[%s0 + $0x40] sm:$0xff]
  %v23 = vld [vmem:[%s0 + $0x48] sm:$0xff]
  %v24 = vld [vmem:[%s0 + $0x50] sm:$0xff]
  %v25 = vld [vmem:[%s0 + $0x58] sm:$0xff]
  %v26 = vld [vmem:[%s0 + $0x60] sm:$0xff]
  %v27 = vld [vmem:[%s0 + $0x68] sm:$0xff]
  %v28 = vld [vmem:[%s0 + $0x70] sm:$0xff]
  %v29 = vld [vmem:[%s0 + $0x78] sm:$0xff]
  %v30 = vld [vmem:[%s1] sm:$0xff]
  %v31 = vld [vmem:[%s1 + $0x8] sm:$0xff]
  %v32 = vld [vmem:[%s1 + $0x10] sm:$0xff]
  %v33 = vld [vmem:[%s1 + $0x18] sm:$0xff]
  %v34 = vld [vmem:[%s1 + $0x20] sm:$0xff]
  %v35 = vld [vmem:[%s1 + $0x28] sm:$0xff]
  %v36 = vld [vmem:[%s1 + $0x30] sm:$0xff]
  %v37 = vld [vmem:[%s1 + $0x38] sm:$0xff]
  %v38 = vld [vmem:[%s1 + $0x40] sm:$0xff]
  %v39 = vld [vmem:[%s1 + $0x48] sm:$0xff]
  %v40 = vld [vmem:[%s1 + $0x50] sm:$0xff]
  %v41 = vld [vmem:[%s1 + $0x58] sm:$0xff]
  %v42 = vld [vmem:[%s1 + $0x60] sm:$0xff]
  %v43 = vld [vmem:[%s1 + $0x68] sm:$0xff]
  %v44 = vld [vmem:[%s1 + $0x70] sm:$0xff]
  %v45 = vld [vmem:[%s1 + $0x78] sm:$0xff]
  %46 = vmatprep.subr.mxu0 0.0
  %47 = vmatpush1.msra.mxu0 %v30
  %48 = vmatprep.subr.mxu0 0.0
  %49 = vmatpush1.msra.mxu0 %v31
  %50 = vmatprep.subr.mxu0 0.0
  %51 = vmatpush1.msra.mxu0 %v32
  %52 = vmatprep.subr.mxu0 0.0
  %53 = vmatpush1.msra.mxu0 %v33
  %54 = vmatprep.subr.mxu0 0.0
  %55 = vmatpush1.msra.mxu0 %v34
  %56 = vmatprep.subr.mxu0 0.0
  %57 = vmatpush1.msra.mxu0 %v35
  %58 = vmatprep.subr.mxu0 0.0
  %59 = vmatpush1.msra.mxu0 %v36
  %60 = vmatprep.subr.mxu0 0.0
  %61 = vmatpush1.msra.mxu0 %v37
  %62 = vmatprep.subr.mxu0 0.0
  %63 = vmatpush1.msra.mxu0 %v38
  %64 = vmatprep.subr.mxu0 0.0
  %65 = vmatpush1.msra.mxu0 %v39
  %66 = vmatprep.subr.mxu0 0.0
  %67 = vmatpush1.msra.mxu0 %v40
  %68 = vmatprep.subr.mxu0 0.0
  %69 = vmatpush1.msra.mxu0 %v41
  %70 = vmatprep.subr.mxu0 0.0
  %71 = vmatpush1.msra.mxu0 %v42
  %72 = vmatprep.subr.mxu0 0.0
  %73 = vmatpush1.msra.mxu0 %v43
  %74 = vmatprep.subr.mxu0 0.0
  %75 = vmatpush1.msra.mxu0 %v44
  %76 = vmatprep.subr.mxu0 0.0
  %77 = vmatpush1.msra.mxu0 %v45
  %78 = vmatprep.subr.mxu0 0.0
  %79 = vmatpush1.msra.mxu0 0.0
  %80 = vmatprep.subr.mxu0 0.0
  %81 = vmatpush1.msra.mxu0 0.0
  %82 = vmatprep.subr.mxu0 0.0
  %83 = vmatpush1.msra.mxu0 0.0
  %84 = vmatprep.subr.mxu0 0.0
  %85 = vmatpush1.msra.mxu0 0.0
  %86 = vmatprep.subr.mxu0 0.0
  %87 = vmatpush1.msra.mxu0 0.0
  %88 = vmatprep.subr.mxu0 0.0
  %89 = vmatpush1.msra.mxu0 0.0
  %90 = vmatprep.subr.mxu0 0.0
  %91 = vmatpush1.msra.mxu0 0.0
  %92 = vmatprep.subr.mxu0 0.0
  %93 = vmatpush1.msra.mxu0 0.0
  %94 = vmatprep.subr.mxu0 0.0
  %95 = vmatpush1.msra.mxu0 0.0
  %96 = vmatprep.subr.mxu0 0.0
  %97 = vmatpush1.msra.mxu0 0.0
  %98 = vmatprep.subr.mxu0 0.0
  %99 = vmatpush1.msra.mxu0 0.0
  %100 = vmatprep.subr.mxu0 0.0
  %101 = vmatpush1.msra.mxu0 0.0
  %102 = vmatprep.subr.mxu0 0.0
  %103 = vmatpush1.msra.mxu0 0.0
  %104 = vmatprep.subr.mxu0 0.0
  %105 = vmatpush1.msra.mxu0 0.0
  %106 = vmatprep.subr.mxu0 0.0
  %107 = vmatpush1.msra.mxu0 0.0
  %108 = vmatprep.subr.mxu0 0.0
  %109 = vmatpush1.msra.mxu0 0.0
  %110 = vmatprep.mubr.f32.mxu0 0.0
  %111 = vmatmul.mubr.f32.gmra.mrb[0].mxu0 %v14
  %v112 = vpop.f32.mrb[0].mxu0
  %v113 = vadd.f32 0.0, %v112
  %v114 = vpop.f32.mrb[0].mxu0
  %115 = vmatprep.mubr.f32.mxu0 0.0
  %116 = vmatmul.mubr.f32.gmra.mrb[0].mxu0 %v15
  %v117 = vpop.f32.mrb[0].mxu0
  %v118 = vadd.f32 0.0, %v117
  %v119 = vpop.f32.mrb[0].mxu0
  %120 = vmatprep.mubr.f32.mxu0 0.0
  %121 = vmatmul.mubr.f32.gmra.mrb[0].mxu0 %v16
  %v122 = vpop.f32.mrb[0].mxu0
  %v123 = vadd.f32 0.0, %v122
  %v124 = vpop.f32.mrb[0].mxu0
  %125 = vmatprep.mubr.f32.mxu0 0.0
  %126 = vmatmul.mubr.f32.gmra.mrb[0].mxu0 %v17
  %v127 = vpop.f32.mrb[0].mxu0
  %v128 = vadd.f32 0.0, %v127
  %v129 = vpop.f32.mrb[0].mxu0
  %130 = vmatprep.mubr.f32.mxu0 0.0
  %131 = vmatmul.mubr.f32.gmra.mrb[0].mxu0 %v18
  %v132 = vpop.f32.mrb[0].mxu0
  %v133 = vadd.f32 0.0, %v132
  %v134 = vpop.f32.mrb[0].mxu0
  %135 = vmatprep.mubr.f32.mxu0 0.0
  %136 = vmatmul.mubr.f32.gmra.mrb[0].mxu0 %v19
  %v137 = vpop.f32.mrb[0].mxu0
  %v138 = vadd.f32 0.0, %v137
  %v139 = vpop.f32.mrb[0].mxu0
  %140 = vmatprep.mubr.f32.mxu0 0.0
  %141 = vmatmul.mubr.f32.gmra.mrb[0].mxu0 %v20
  %v142 = vpop.f32.mrb[0].mxu0
  %v143 = vadd.f32 0.0, %v142
  %v144 = vpop.f32.mrb[0].mxu0
  %145 = vmatprep.mubr.f32.mxu0 0.0
  %146 = vmatmul.mubr.f32.gmra.mrb[0].mxu0 %v21
  %v147 = vpop.f32.mrb[0].mxu0
  %v148 = vadd.f32 0.0, %v147
  %v149 = vpop.f32.mrb[0].mxu0
  %150 = vmatprep.mubr.f32.mxu0 0.0
  %151 = vmatmul.mubr.f32.gmra.mrb[0].mxu0 %v22
  %v152 = vpop.f32.mrb[0].mxu0
  %v153 = vadd.f32 0.0, %v152
  %v154 = vpop.f32.mrb[0].mxu0
  %155 = vmatprep.mubr.f32.mxu0 0.0
  %156 = vmatmul.mubr.f32.gmra.mrb[0].mxu0 %v23
  %v157 = vpop.f32.mrb[0].mxu0
  %v158 = vadd.f32 0.0, %v157
  %v159 = vpop.f32.mrb[0].mxu0
  %160 = vmatprep.mubr.f32.mxu0 0.0
  %161 = vmatmul.mubr.f32.gmra.mrb[0].mxu0 %v24
  %v162 = vpop.f32.mrb[0].mxu0
  %v163 = vadd.f32 0.0, %v162
  %v164 = vpop.f32.mrb[0].mxu0
  %165 = vmatprep.mubr.f32.mxu0 0.0
  %166 = vmatmul.mubr.f32.gmra.mrb[0].mxu0 %v25
  %v167 = vpop.f32.mrb[0].mxu0
  %v168 = vadd.f32 0.0, %v167
  %v169 = vpop.f32.mrb[0].mxu0
  %170 = vmatprep.mubr.f32.mxu0 0.0
  %171 = vmatmul.mubr.f32.gmra.mrb[0].mxu0 %v26
  %v172 = vpop.f32.mrb[0].mxu0
  %v173 = vadd.f32 0.0, %v172
  %v174 = vpop.f32.mrb[0].mxu0
  %175 = vmatprep.mubr.f32.mxu0 0.0
  %176 = vmatmul.mubr.f32.gmra.mrb[0].mxu0 %v27
  %v177 = vpop.f32.mrb[0].mxu0
  %v178 = vadd.f32 0.0, %v177
  %v179 = vpop.f32.mrb[0].mxu0
  %180 = vmatprep.mubr.f32.mxu0 0.0
  %181 = vmatmul.mubr.f32.gmra.mrb[0].mxu0 %v28
  %v182 = vpop.f32.mrb[0].mxu0
  %v183 = vadd.f32 0.0, %v182
  %v184 = vpop.f32.mrb[0].mxu0
  %185 = vmatprep.mubr.f32.mxu0 0.0
  %186 = vmatmul.mubr.f32.gmra.mrb[0].mxu0 %v29
  %v187 = vpop.f32.mrb[0].mxu0
  %v188 = vadd.f32 0.0, %v187
  %v189 = vpop.f32.mrb[0].mxu0
  %190 = vdwg.mxu0
  %vm191 = vcmask 64512
  %v192 = vsel %vm191, %v113, 0.0
  %v193 = vsel %vm191, %v118, 0.0
  %v194 = vadd.f32 %v192, %v193
  %v195 = vsel %vm191, %v123, 0.0
  %v196 = vadd.f32 %v194, %v195
  %v197 = vsel %vm191, %v128, 0.0
  %v198 = vadd.f32 %v196, %v197
  %v199 = vsel %vm191, %v133, 0.0
  %v200 = vadd.f32 %v198, %v199
  %v201 = vsel %vm191, %v138, 0.0
  %v202 = vadd.f32 %v200, %v201
  %v203 = vsel %vm191, %v143, 0.0
  %v204 = vadd.f32 %v202, %v203
  %v205 = vsel %vm191, %v148, 0.0
  %v206 = vadd.f32 %v204, %v205
  %v207 = vsel %vm191, %v153, 0.0
  %v208 = vadd.f32 %v206, %v207
  %v209 = vsel %vm191, %v158, 0.0
  %v210 = vadd.f32 %v208, %v209
  %v211 = vsel %vm191, %v163, 0.0
  %v212 = vadd.f32 %v210, %v211
  %v213 = vsel %vm191, %v168, 0.0
  %v214 = vadd.f32 %v212, %v213
  %v215 = vsel %vm191, %v173, 0.0
  %v216 = vadd.f32 %v214, %v215
  %v217 = vsel %vm191, %v178, 0.0
  %v218 = vadd.f32 %v216, %v217
  %v219 = vsel %vm191, %v183, 0.0
  %v220 = vadd.f32 %v218, %v219
  %v221 = vsel %vm191, %v188, 0.0
  %v222 = vadd.f32 %v220, %v221
  %v223 = vrot.slane %v222, 4
  %v224 = vadd.f32 %v222, %v223
  %v225 = vrot.slane %v224, 2
  %v226 = vadd.f32 %v224, %v225
  %v227 = vrot.slane %v226, 1
  %v228 = vadd.f32 %v226, %v227
  %v229 = vrcp.pop 128.0
  %v230 = vmul.f32 %v228, %v229
  %v231 = vsub.f32 %v113, %v230
  %v232 = vsub.f32 %v118, %v230
  %v233 = vsub.f32 %v123, %v230
  %v234 = vsub.f32 %v128, %v230
  %v235 = vsub.f32 %v133, %v230
  %v236 = vsub.f32 %v138, %v230
  %v237 = vsub.f32 %v143, %v230
  %v238 = vsub.f32 %v148, %v230
  %v239 = vsub.f32 %v153, %v230
  %v240 = vsub.f32 %v158, %v230
  %v241 = vsub.f32 %v163, %v230
  %v242 = vsub.f32 %v168, %v230
  %v243 = vsub.f32 %v173, %v230
  %v244 = vsub.f32 %v178, %v230
  %v245 = vsub.f32 %v183, %v230
  %v246 = vsub.f32 %v188, %v230
  %v247 = vmul.f32 %v231, %v231
  %v248 = vmul.f32 %v232, %v232
  %v249 = vmul.f32 %v233, %v233
  %v250 = vmul.f32 %v234, %v234
  %v251 = vmul.f32 %v235, %v235
  %v252 = vmul.f32 %v236, %v236
  %v253 = vmul.f32 %v237, %v237
  %v254 = vmul.f32 %v238, %v238
  %v255 = vmul.f32 %v239, %v239
  %v256 = vmul.f32 %v240, %v240
  %v257 = vmul.f32 %v241, %v241
  %v258 = vmul.f32 %v242, %v242
  %v259 = vmul.f32 %v243, %v243
  %v260 = vmul.f32 %v244, %v244
  %v261 = vmul.f32 %v245, %v245
  %v262 = vmul.f32 %v246, %v246
  %v263 = vsel %vm191, %v247, 0.0
  %v264 = vsel %vm191, %v248, 0.0
  %v265 = vadd.f32 %v263, %v264
  %v266 = vsel %vm191, %v249, 0.0
  %v267 = vadd.f32 %v265, %v266
  %v268 = vsel %vm191, %v250, 0.0
  %v269 = vadd.f32 %v267, %v268
  %v270 = vsel %vm191, %v251, 0.0
  %v271 = vadd.f32 %v269, %v270
  %v272 = vsel %vm191, %v252, 0.0
  %v273 = vadd.f32 %v271, %v272
  %v274 = vsel %vm191, %v253, 0.0
  %v275 = vadd.f32 %v273, %v274
  %v276 = vsel %vm191, %v254, 0.0
  %v277 = vadd.f32 %v275, %v276
  %v278 = vsel %vm191, %v255, 0.0
  %v279 = vadd.f32 %v277, %v278
  %v280 = vsel %vm191, %v256, 0.0
  %v281 = vadd.f32 %v279, %v280
  %v282 = vsel %vm191, %v257, 0.0
  %v283 = vadd.f32 %v281, %v282
  %v284 = vsel %vm191, %v258, 0.0
  %v285 = vadd.f32 %v283, %v284
  %v286 = vsel %vm191, %v259, 0.0
  %v287 = vadd.f32 %v285, %v286
  %v288 = vsel %vm191, %v260, 0.0
  %v289 = vadd.f32 %v287, %v288
  %v290 = vsel %vm191, %v261, 0.0
  %v291 = vadd.f32 %v289, %v290
  %v292 = vsel %vm191, %v262, 0.0
  %v293 = vadd.f32 %v291, %v292
  %v294 = vrot.slane %v293, 4
  %v295 = vadd.f32 %v293, %v294
  %v296 = vrot.slane %v295, 2
  %v297 = vadd.f32 %v295, %v296
  %v298 = vrot.slane %v297, 1
  %v299 = vadd.f32 %v297, %v298
  %v300 = vmul.f32 %v299, %v229
  %v301 = vld [vmem:[%s2] sm:$0x3]
  %v302 = vadd.f32 %v300, 1e-05
  %v303 = vrsqrt.pop %v302
  %v304 = vmul.f32 %v301, %v303
  %v305 = vlaneseq
  %v306 = vshrl.u32 %v305, 7
  %v307 = vsub.s32 0, %v306
  %v308 = vrot.slane %v304, %v307
  %v309 = vmul.f32 %v231, %v308
  %v310 = vmul.f32 %v232, %v308
  %v311 = vmul.f32 %v233, %v308
  %v312 = vmul.f32 %v234, %v308
  %v313 = vmul.f32 %v235, %v308
  %v314 = vmul.f32 %v236, %v308
  %v315 = vmul.f32 %v237, %v308
  %v316 = vmul.f32 %v238, %v308
  %v317 = vmul.f32 %v239, %v308
  %v318 = vmul.f32 %v240, %v308
  %v319 = vmul.f32 %v241, %v308
  %v320 = vmul.f32 %v242, %v308
  %v321 = vmul.f32 %v243, %v308
  %v322 = vmul.f32 %v244, %v308
  %v323 = vmul.f32 %v245, %v308
  %v324 = vmul.f32 %v246, %v308
  %v325 = vlaneseq
  %v326 = vshrl.u32 %v325, 7
  %v327 = vsub.s32 1, %v326
  %v328 = vrot.slane %v301, %v327
  %v329 = vadd.f32 %v309, %v328
  %v330 = vadd.f32 %v310, %v328
  %v331 = vadd.f32 %v311, %v328
  %v332 = vadd.f32 %v312, %v328
  %v333 = vadd.f32 %v313, %v328
  %v334 = vadd.f32 %v314, %v328
  %v335 = vadd.f32 %v315, %v328
  %v336 = vadd.f32 %v316, %v328
  %v337 = vadd.f32 %v317, %v328
  %v338 = vadd.f32 %v318, %v328
  %v339 = vadd.f32 %v319, %v328
  %v340 = vadd.f32 %v320, %v328
  %v341 = vadd.f32 %v321, %v328
  %v342 = vadd.f32 %v322, %v328
  %v343 = vadd.f32 %v323, %v328
  %v344 = vadd.f32 %v324, %v328
  %vm345 = vcmp.ge.f32.partialorder %v329, 0.0
  %vm346 = vcmp.ge.f32.partialorder %v330, 0.0
  %vm347 = vcmp.ge.f32.partialorder %v331, 0.0
  %vm348 = vcmp.ge.f32.partialorder %v332, 0.0
  %vm349 = vcmp.ge.f32.partialorder %v333, 0.0
  %vm350 = vcmp.ge.f32.partialorder %v334, 0.0
  %vm351 = vcmp.ge.f32.partialorder %v335, 0.0
  %vm352 = vcmp.ge.f32.partialorder %v336, 0.0
  %vm353 = vcmp.ge.f32.partialorder %v337, 0.0
  %vm354 = vcmp.ge.f32.partialorder %v338, 0.0
  %vm355 = vcmp.ge.f32.partialorder %v339, 0.0
  %vm356 = vcmp.ge.f32.partialorder %v340, 0.0
  %vm357 = vcmp.ge.f32.partialorder %v341, 0.0
  %vm358 = vcmp.ge.f32.partialorder %v342, 0.0
  %vm359 = vcmp.ge.f32.partialorder %v343, 0.0
  %vm360 = vcmp.ge.f32.partialorder %v344, 0.0
  %v361 = vmul.f32 %v329, 0.2
  %v362 = vmul.f32 %v330, 0.2
  %v363 = vmul.f32 %v331, 0.2
  %v364 = vmul.f32 %v332, 0.2
  %v365 = vmul.f32 %v333, 0.2
  %v366 = vmul.f32 %v334, 0.2
  %v367 = vmul.f32 %v335, 0.2
  %v368 = vmul.f32 %v336, 0.2
  %v369 = vmul.f32 %v337, 0.2
  %v370 = vmul.f32 %v338, 0.2
  %v371 = vmul.f32 %v339, 0.2
  %v372 = vmul.f32 %v340, 0.2
  %v373 = vmul.f32 %v341, 0.2
  %v374 = vmul.f32 %v342, 0.2
  %v375 = vmul.f32 %v343, 0.2
  %v376 = vmul.f32 %v344, 0.2
  %v377 = vsel %vm345, %v329, %v361
  %v378 = vsel %vm346, %v330, %v362
  %v379 = vsel %vm347, %v331, %v363
  %v380 = vsel %vm348, %v332, %v364
  %v381 = vsel %vm349, %v333, %v365
  %v382 = vsel %vm350, %v334, %v366
  %v383 = vsel %vm351, %v335, %v367
  %v384 = vsel %vm352, %v336, %v368
  %v385 = vsel %vm353, %v337, %v369
  %v386 = vsel %vm354, %v338, %v370
  %v387 = vsel %vm355, %v339, %v371
  %v388 = vsel %vm356, %v340, %v372
  %v389 = vsel %vm357, %v341, %v373
  %v390 = vsel %vm358, %v342, %v374
  %v391 = vsel %vm359, %v343, %v375
  %v392 = vsel %vm360, %v344, %v376
  %393 = vst.msk [vmem:[%s3] sm:$0xff] %vm191, %v377
  %394 = vst.msk [vmem:[%s3 + $0x8] sm:$0xff] %vm191, %v378
  %395 = vst.msk [vmem:[%s3 + $0x10] sm:$0xff] %vm191, %v379
  %396 = vst.msk [vmem:[%s3 + $0x18] sm:$0xff] %vm191, %v380
  %397 = vst.msk [vmem:[%s3 + $0x20] sm:$0xff] %vm191, %v381
  %398 = vst.msk [vmem:[%s3 + $0x28] sm:$0xff] %vm191, %v382
  %399 = vst.msk [vmem:[%s3 + $0x30] sm:$0xff] %vm191, %v383
  %400 = vst.msk [vmem:[%s3 + $0x38] sm:$0xff] %vm191, %v384
  %401 = vst.msk [vmem:[%s3 + $0x40] sm:$0xff] %vm191, %v385
  %402 = vst.msk [vmem:[%s3 + $0x48] sm:$0xff] %vm191, %v386
  %403 = vst.msk [vmem:[%s3 + $0x50] sm:$0xff] %vm191, %v387
  %404 = vst.msk [vmem:[%s3 + $0x58] sm:$0xff] %vm191, %v388
  %405 = vst.msk [vmem:[%s3 + $0x60] sm:$0xff] %vm191, %v389
  %406 = vst.msk [vmem:[%s3 + $0x68] sm:$0xff] %vm191, %v390
  %407 = vst.msk [vmem:[%s3 + $0x70] sm:$0xff] %vm191, %v391
  %408 = vst.msk [vmem:[%s3 + $0x78] sm:$0xff] %vm191, %v392
  // Predicated region
  $region14: #{_lambda_.3} parent=0 // pred_check
    _
  $region15: #{_lambda_.3} parent=0 // pred_check_branch
    %410 = sbr.rel (0) target = $region17
  $region16: #{_lambda_.3} parent=0 // pred_region
    _
  $region17: #{_lambda_.3} parent=0 // pred_fallthru
    _
  // Predicated region
  $region18: #{_lambda_.3} parent=0 // pred_check
    _
  $region19: #{_lambda_.3} parent=0 // pred_check_branch
    %412 = sbr.rel (0) target = $region21
  $region20: #{_lambda_.3} parent=0 // pred_region
    _
  $region21: #{_lambda_.3} parent=0 // pred_fallthru
    _

// kernel: _lambda_.4
$region0: #{_lambda_.4}
  #allocation0 [shape = 'u32[]', space=smem, size = 0x4, offset = 0x4, fixed_abs, tag = 'smem constant byte address 0x4 - core index']
  #allocation1 [shape = 'u32[144,128]{1,0:T(1,128)}', space=vmem, size = 0x12000, scoped, tag = 'internal scratch']
  %s0 = inlined_call_operand.vmem [shape: f32[32,128], index: 0, kind: input, shape index: {}]
  %s1 = inlined_call_operand.vmem [shape: f32[128,16], index: 1, kind: input, shape index: {}]
  %s2 = inlined_call_operand.vmem [shape: f32[2,16], index: 2, kind: input, shape index: {}]
  %s3 = inlined_call_operand.vmem [shape: f32[32,16], index: 3, kind: output, shape index: {}]
  %s4 = sld [smem:[#allocation0]]
  $region22: #{_lambda_.4} parent=0
    _
  %s6 = ssub.s32 1, %s4
  %s7 = scalar_select 0, %s6, %s4
  // Predicated region
  $region2: #{_lambda_.4} parent=0 // pred_check
    _
  $region3: #{_lambda_.4} parent=0 // pred_check_branch
    %9 = sbr.rel (0) target = $region5
  $region4: #{_lambda_.4} parent=0 // pred_region
    _
  $region5: #{_lambda_.4} parent=0 // pred_fallthru
    _
  // Predicated region
  $region6: #{_lambda_.4} parent=0 // pred_check
    _
  $region7: #{_lambda_.4} parent=0 // pred_check_branch
    %11 = sbr.rel (0) target = $region9
  $region8: #{_lambda_.4} parent=0 // pred_region
    _
  $region9: #{_lambda_.4} parent=0 // pred_fallthru
    _
  // Predicated region
  $region10: #{_lambda_.4} parent=0 // pred_check
    _
  $region11: #{_lambda_.4} parent=0 // pred_check_branch
    %13 = sbr.rel (0) target = $region13
  $region12: #{_lambda_.4} parent=0 // pred_region
    _
  $region13: #{_lambda_.4} parent=0 // pred_fallthru
    _
  %v14 = vld [vmem:[%s0] sm:$0xff]
  %v15 = vld [vmem:[%s0 + $0x8] sm:$0xff]
  %v16 = vld [vmem:[%s0 + $0x10] sm:$0xff]
  %v17 = vld [vmem:[%s0 + $0x18] sm:$0xff]
  %v18 = vld [vmem:[%s1] sm:$0xff]
  %v19 = vld [vmem:[%s1 + $0x8] sm:$0xff]
  %v20 = vld [vmem:[%s1 + $0x10] sm:$0xff]
  %v21 = vld [vmem:[%s1 + $0x18] sm:$0xff]
  %v22 = vld [vmem:[%s1 + $0x20] sm:$0xff]
  %v23 = vld [vmem:[%s1 + $0x28] sm:$0xff]
  %v24 = vld [vmem:[%s1 + $0x30] sm:$0xff]
  %v25 = vld [vmem:[%s1 + $0x38] sm:$0xff]
  %v26 = vld [vmem:[%s1 + $0x40] sm:$0xff]
  %v27 = vld [vmem:[%s1 + $0x48] sm:$0xff]
  %v28 = vld [vmem:[%s1 + $0x50] sm:$0xff]
  %v29 = vld [vmem:[%s1 + $0x58] sm:$0xff]
  %v30 = vld [vmem:[%s1 + $0x60] sm:$0xff]
  %v31 = vld [vmem:[%s1 + $0x68] sm:$0xff]
  %v32 = vld [vmem:[%s1 + $0x70] sm:$0xff]
  %v33 = vld [vmem:[%s1 + $0x78] sm:$0xff]
  %34 = vmatprep.subr.mxu0 0.0
  %35 = vmatpush1.msra.mxu0 %v18
  %36 = vmatprep.subr.mxu0 0.0
  %37 = vmatpush1.msra.mxu0 %v19
  %38 = vmatprep.subr.mxu0 0.0
  %39 = vmatpush1.msra.mxu0 %v20
  %40 = vmatprep.subr.mxu0 0.0
  %41 = vmatpush1.msra.mxu0 %v21
  %42 = vmatprep.subr.mxu0 0.0
  %43 = vmatpush1.msra.mxu0 %v22
  %44 = vmatprep.subr.mxu0 0.0
  %45 = vmatpush1.msra.mxu0 %v23
  %46 = vmatprep.subr.mxu0 0.0
  %47 = vmatpush1.msra.mxu0 %v24
  %48 = vmatprep.subr.mxu0 0.0
  %49 = vmatpush1.msra.mxu0 %v25
  %50 = vmatprep.subr.mxu0 0.0
  %51 = vmatpush1.msra.mxu0 %v26
  %52 = vmatprep.subr.mxu0 0.0
  %53 = vmatpush1.msra.mxu0 %v27
  %54 = vmatprep.subr.mxu0 0.0
  %55 = vmatpush1.msra.mxu0 %v28
  %56 = vmatprep.subr.mxu0 0.0
  %57 = vmatpush1.msra.mxu0 %v29
  %58 = vmatprep.subr.mxu0 0.0
  %59 = vmatpush1.msra.mxu0 %v30
  %60 = vmatprep.subr.mxu0 0.0
  %61 = vmatpush1.msra.mxu0 %v31
  %62 = vmatprep.subr.mxu0 0.0
  %63 = vmatpush1.msra.mxu0 %v32
  %64 = vmatprep.subr.mxu0 0.0
  %65 = vmatpush1.msra.mxu0 %v33
  %66 = vmatprep.subr.mxu0 0.0
  %67 = vmatpush1.msra.mxu0 0.0
  %68 = vmatprep.subr.mxu0 0.0
  %69 = vmatpush1.msra.mxu0 0.0
  %70 = vmatprep.subr.mxu0 0.0
  %71 = vmatpush1.msra.mxu0 0.0
  %72 = vmatprep.subr.mxu0 0.0
  %73 = vmatpush1.msra.mxu0 0.0
  %74 = vmatprep.subr.mxu0 0.0
  %75 = vmatpush1.msra.mxu0 0.0
  %76 = vmatprep.subr.mxu0 0.0
  %77 = vmatpush1.msra.mxu0 0.0
  %78 = vmatprep.subr.mxu0 0.0
  %79 = vmatpush1.msra.mxu0 0.0
  %80 = vmatprep.subr.mxu0 0.0
  %81 = vmatpush1.msra.mxu0 0.0
  %82 = vmatprep.subr.mxu0 0.0
  %83 = vmatpush1.msra.mxu0 0.0
  %84 = vmatprep.subr.mxu0 0.0
  %85 = vmatpush1.msra.mxu0 0.0
  %86 = vmatprep.subr.mxu0 0.0
  %87 = vmatpush1.msra.mxu0 0.0
  %88 = vmatprep.subr.mxu0 0.0
  %89 = vmatpush1.msra.mxu0 0.0
  %90 = vmatprep.subr.mxu0 0.0
  %91 = vmatpush1.msra.mxu0 0.0
  %92 = vmatprep.subr.mxu0 0.0
  %93 = vmatpush1.msra.mxu0 0.0
  %94 = vmatprep.subr.mxu0 0.0
  %95 = vmatpush1.msra.mxu0 0.0
  %96 = vmatprep.subr.mxu0 0.0
  %97 = vmatpush1.msra.mxu0 0.0
  %98 = vmatprep.mubr.f32.mxu0 0.0
  %99 = vmatmul.mubr.f32.gmra.mrb[0].mxu0 %v14
  %v100 = vpop.f32.mrb[0].mxu0
  %v101 = vadd.f32 0.0, %v100
  %v102 = vpop.f32.mrb[0].mxu0
  %103 = vmatprep.mubr.f32.mxu0 0.0
  %104 = vmatmul.mubr.f32.gmra.mrb[0].mxu0 %v15
  %v105 = vpop.f32.mrb[0].mxu0
  %v106 = vadd.f32 0.0, %v105
  %v107 = vpop.f32.mrb[0].mxu0
  %108 = vmatprep.mubr.f32.mxu0 0.0
  %109 = vmatmul.mubr.f32.gmra.mrb[0].mxu0 %v16
  %v110 = vpop.f32.mrb[0].mxu0
  %v111 = vadd.f32 0.0, %v110
  %v112 = vpop.f32.mrb[0].mxu0
  %113 = vmatprep.mubr.f32.mxu0 0.0
  %114 = vmatmul.mubr.f32.gmra.mrb[0].mxu0 %v17
  %v115 = vpop.f32.mrb[0].mxu0
  %v116 = vadd.f32 0.0, %v115
  %v117 = vpop.f32.mrb[0].mxu0
  %118 = vdwg.mxu0
  %vm119 = vcmask 130048
  %v120 = vsel %vm119, %v101, 0.0
  %v121 = vsel %vm119, %v106, 0.0
  %v122 = vadd.f32 %v120, %v121
  %v123 = vsel %vm119, %v111, 0.0
  %v124 = vadd.f32 %v122, %v123
  %v125 = vsel %vm119, %v116, 0.0
  %v126 = vadd.f32 %v124, %v125
  %v127 = vrot.slane %v126, 4
  %v128 = vadd.f32 %v126, %v127
  %v129 = vrot.slane %v128, 2
  %v130 = vadd.f32 %v128, %v129
  %v131 = vrot.slane %v130, 1
  %v132 = vadd.f32 %v130, %v131
  %v133 = vrcp.pop 32.0
  %v134 = vmul.f32 %v132, %v133
  %v135 = vsub.f32 %v101, %v134
  %v136 = vsub.f32 %v106, %v134
  %v137 = vsub.f32 %v111, %v134
  %v138 = vsub.f32 %v116, %v134
  %v139 = vmul.f32 %v135, %v135
  %v140 = vmul.f32 %v136, %v136
  %v141 = vmul.f32 %v137, %v137
  %v142 = vmul.f32 %v138, %v138
  %v143 = vsel %vm119, %v139, 0.0
  %v144 = vsel %vm119, %v140, 0.0
  %v145 = vadd.f32 %v143, %v144
  %v146 = vsel %vm119, %v141, 0.0
  %v147 = vadd.f32 %v145, %v146
  %v148 = vsel %vm119, %v142, 0.0
  %v149 = vadd.f32 %v147, %v148
  %v150 = vrot.slane %v149, 4
  %v151 = vadd.f32 %v149, %v150
  %v152 = vrot.slane %v151, 2
  %v153 = vadd.f32 %v151, %v152
  %v154 = vrot.slane %v153, 1
  %v155 = vadd.f32 %v153, %v154
  %v156 = vmul.f32 %v155, %v133
  %v157 = vld [vmem:[%s2] sm:$0x3]
  %v158 = vadd.f32 %v156, 1e-05
  %v159 = vrsqrt.pop %v158
  %v160 = vmul.f32 %v157, %v159
  %v161 = vlaneseq
  %v162 = vshrl.u32 %v161, 7
  %v163 = vsub.s32 0, %v162
  %v164 = vrot.slane %v160, %v163
  %v165 = vmul.f32 %v135, %v164
  %v166 = vmul.f32 %v136, %v164
  %v167 = vmul.f32 %v137, %v164
  %v168 = vmul.f32 %v138, %v164
  %v169 = vlaneseq
  %v170 = vshrl.u32 %v169, 7
  %v171 = vsub.s32 1, %v170
  %v172 = vrot.slane %v157, %v171
  %v173 = vadd.f32 %v165, %v172
  %v174 = vadd.f32 %v166, %v172
  %v175 = vadd.f32 %v167, %v172
  %v176 = vadd.f32 %v168, %v172
  %vm177 = vcmp.ge.f32.partialorder %v173, 0.0
  %vm178 = vcmp.ge.f32.partialorder %v174, 0.0
  %vm179 = vcmp.ge.f32.partialorder %v175, 0.0
  %vm180 = vcmp.ge.f32.partialorder %v176, 0.0
  %v181 = vmul.f32 %v173, 0.2
  %v182 = vmul.f32 %v174, 0.2
  %v183 = vmul.f32 %v175, 0.2
  %v184 = vmul.f32 %v176, 0.2
  %v185 = vsel %vm177, %v173, %v181
  %v186 = vsel %vm178, %v174, %v182
  %v187 = vsel %vm179, %v175, %v183
  %v188 = vsel %vm180, %v176, %v184
  %189 = vst.msk [vmem:[%s3] sm:$0xff] %vm119, %v185
  %190 = vst.msk [vmem:[%s3 + $0x8] sm:$0xff] %vm119, %v186
  %191 = vst.msk [vmem:[%s3 + $0x10] sm:$0xff] %vm119, %v187
  %192 = vst.msk [vmem:[%s3 + $0x18] sm:$0xff] %vm119, %v188
  // Predicated region
  $region14: #{_lambda_.4} parent=0 // pred_check
    _
  $region15: #{_lambda_.4} parent=0 // pred_check_branch
    %194 = sbr.rel (0) target = $region17
  $region16: #{_lambda_.4} parent=0 // pred_region
    _
  $region17: #{_lambda_.4} parent=0 // pred_fallthru
    _
  // Predicated region
  $region18: #{_lambda_.4} parent=0 // pred_check
    _
  $region19: #{_lambda_.4} parent=0 // pred_check_branch
    %196 = sbr.rel (0) target = $region21
  $region20: #{_lambda_.4} parent=0 // pred_region
    _
  $region21: #{_lambda_.4} parent=0 // pred_fallthru
    _

// kernel: _lambda_.5
$region0: #{_lambda_.5}
  #allocation0 [shape = 'u32[]', space=smem, size = 0x4, offset = 0x4, fixed_abs, tag = 'smem constant byte address 0x4 - core index']
  #allocation1 [shape = 'u32[144,128]{1,0:T(1,128)}', space=vmem, size = 0x12000, scoped, tag = 'internal scratch']
  %s0 = inlined_call_operand.vmem [shape: f32[2,256], index: 0, kind: input, shape index: {}]
  %s1 = inlined_call_operand.vmem [shape: f32[256,1], index: 1, kind: input, shape index: {}]
  %s2 = inlined_call_operand.vmem [shape: f32[2], index: 2, kind: input, shape index: {}]
  %s3 = inlined_call_operand.vmem [shape: f32[2,1], index: 3, kind: output, shape index: {}]
  %s4 = sld [smem:[#allocation0]]
  $region26: #{_lambda_.5} parent=0
    _
  %s6 = ssub.s32 1, %s4
  %s7 = scalar_select 0, %s6, %s4
  $region1: #{_lambda_.5} parent=0
    #allocation2 [shape = 'u8[512]{0}', space=smem, size = 0x200, scoped, tag = 'input window, operand 2, single buffered']
    #allocation3 [shape = 's32[1]{0}', space=sflag, size = 0x4, scoped, tag = 'scoped memory for _lambda_.5']
    %8 = vsyncpa [#allocation3], 0
    // Predicated region
    $region2: #{_lambda_.5} parent=1 // pred_check
      _
    $region3: #{_lambda_.5} parent=1 // pred_check_branch
      %10 = sbr.rel (0) target = $region5
    $region4: #{_lambda_.5} parent=1 // pred_region
      _
    $region5: #{_lambda_.5} parent=1 // pred_fallthru
      _
    // Predicated region
    $region6: #{_lambda_.5} parent=1 // pred_check
      _
    $region7: #{_lambda_.5} parent=1 // pred_check_branch
      %12 = sbr.rel (0) target = $region9
    $region8: #{_lambda_.5} parent=1 // pred_region
      _
    $region9: #{_lambda_.5} parent=1 // pred_fallthru
      _
    // Predicated region
    $region10: #{_lambda_.5} parent=1 // pred_check
      _
    $region11: #{_lambda_.5} parent=1 // pred_check_branch
      %14 = sbr.rel (0) target = $region13
    $region12: #{_lambda_.5} parent=1 // pred_region
      %s16 = ssub.s32 16, 16
      %17 = vsyncadd [#allocation3], %s16
      %s19 = sshll.u32 %s2, 4
      %s20 = int_to_ptr.vmem [resolvable:$true] %s19
      %22 = dma.vmem_to_smem %s20, 16, [#allocation2], [#allocation3]
    $region13: #{_lambda_.5} parent=1 // pred_fallthru
      _
    // Predicated region
    $region14: #{_lambda_.5} parent=1 // pred_check
      _
    $region15: #{_lambda_.5} parent=1 // pred_check_branch
      %24 = sbr.rel (0) target = $region17
    $region16: #{_lambda_.5} parent=1 // pred_region
      %25 = dma.done [#allocation3], 16
    $region17: #{_lambda_.5} parent=1 // pred_fallthru
      _
    %26 = sfence
    %v27 = vld [vmem:[%s0] sm:$0xf]
    %v30 = vunpack.c.l.s4 1983009808
    %v31 = vunpack.c.0.s8 %v30
    %v32 = vlaneseq
    %v33 = vshrl.u32 %v32, 7
    %v34 = vsub.s32 %v31, %v33
    %v35 = vrot.slane %v27, %v34
    %v36 = vcombine.high %v35, %v35
    %vm39 = vcmask 1041408
    %v40 = vsel %vm39, %v35, 0.0
    %v41 = vrot.slane %v40, 4
    %v42 = vadd.f32 %v40, %v41
    %v43 = vrot.slane %v42, 2
    %v44 = vadd.f32 %v42, %v43
    %v45 = vrot.slane %v44, 1
    %v46 = vadd.f32 %v44, %v45
    %v47 = vsel %vm39, %v36, 0.0
    %v48 = vrot.slane %v47, 4
    %v49 = vadd.f32 %v47, %v48
    %v50 = vrot.slane %v49, 2
    %v51 = vadd.f32 %v49, %v50
    %v52 = vrot.slane %v51, 1
    %v53 = vadd.f32 %v51, %v52
    %v54 = vrcp.pop 2.0
    %v55 = vmul.f32 %v46, %v54
    %v56 = vmul.f32 %v53, %v54
    %v59 = vcombine.low %v55, %v56
    %v61 = vunpack.c.l.s4 1983009808
    %v62 = vunpack.c.0.s8 %v61
    %v63 = vlaneseq
    %v64 = vshrl.u32 %v63, 7
    %v65 = vsub.s32 %v62, %v64
    %v66 = vrot.slane %v59, %v65
    %v68 = vsub.f32 %v27, %v66
    %v69 = vmul.f32 %v68, %v68
    %v72 = vunpack.c.l.s4 1983009808
    %v73 = vunpack.c.0.s8 %v72
    %v74 = vlaneseq
    %v75 = vshrl.u32 %v74, 7
    %v76 = vsub.s32 %v73, %v75
    %v77 = vrot.slane %v69, %v76
    %v78 = vcombine.high %v77, %v77
    %v81 = vsel %vm39, %v77, 0.0
    %v82 = vrot.slane %v81, 4
    %v83 = vadd.f32 %v81, %v82
    %v84 = vrot.slane %v83, 2
    %v85 = vadd.f32 %v83, %v84
    %v86 = vrot.slane %v85, 1
    %v87 = vadd.f32 %v85, %v86
    %v88 = vsel %vm39, %v78, 0.0
    %v89 = vrot.slane %v88, 4
    %v90 = vadd.f32 %v88, %v89
    %v91 = vrot.slane %v90, 2
    %v92 = vadd.f32 %v90, %v91
    %v93 = vrot.slane %v92, 1
    %v94 = vadd.f32 %v92, %v93
    %v95 = vrsqrt.pop %v87
    %v96 = vmul.f32 %v87, %v95
    %vm97 = vcmp.eq.f32.partialorder %v87, inf
    %v98 = vsel %vm97, %v87, %v96
    %vm99 = vcmp.eq.f32.partialorder %v87, 0.0
    %v100 = vand.u32 %v87, 2147483648
    %v101 = vsel %vm99, %v100, %v98
    %v102 = vrsqrt.pop %v94
    %v103 = vmul.f32 %v94, %v102
    %vm104 = vcmp.eq.f32.partialorder %v94, inf
    %v105 = vsel %vm104, %v94, %v103
    %vm106 = vcmp.eq.f32.partialorder %v94, 0.0
    %v107 = vand.u32 %v94, 2147483648
    %v108 = vsel %vm106, %v107, %v105
    %vm109 = vcmask 1040384
    %v110 = vsel %vm109, %v101, 0.0
    %v111 = vsel %vm109, %v108, 0.0
    %v112 = vadd.f32 %v110, %v111
    %113 = vadd.xlane.f32.xlu0 %v112
    %v114 = vpop.xlane.xlu0 %113
    %v115 = vrot.slane %v114, 4
    %v116 = vadd.f32 %v114, %v115
    %v117 = vrot.slane %v116, 2
    %v118 = vadd.f32 %v116, %v117
    %v119 = vrot.slane %v118, 1
    %v120 = vadd.f32 %v118, %v119
    %s121 = vtos %v120
    %v122 = vrcp.pop 256.0
    %s123 = vtos %v122
    %s124 = smul.f32 %s121, %s123
    %v125 = vld [vmem:[%s1] sm:$0xff]
    %v126 = vld [vmem:[%s1 + $0x8] sm:$0xff]
    %v127 = vld [vmem:[%s1 + $0x10] sm:$0xff]
    %v128 = vld [vmem:[%s1 + $0x18] sm:$0xff]
    %v129 = vld [vmem:[%s1 + $0x20] sm:$0xff]
    %v130 = vld [vmem:[%s1 + $0x28] sm:$0xff]
    %v131 = vld [vmem:[%s1 + $0x30] sm:$0xff]
    %v132 = vld [vmem:[%s1 + $0x38] sm:$0xff]
    %v133 = vld [vmem:[%s1 + $0x40] sm:$0xff]
    %v134 = vld [vmem:[%s1 + $0x48] sm:$0xff]
    %v135 = vld [vmem:[%s1 + $0x50] sm:$0xff]
    %v136 = vld [vmem:[%s1 + $0x58] sm:$0xff]
    %v137 = vld [vmem:[%s1 + $0x60] sm:$0xff]
    %v138 = vld [vmem:[%s1 + $0x68] sm:$0xff]
    %v139 = vld [vmem:[%s1 + $0x70] sm:$0xff]
    %v140 = vld [vmem:[%s1 + $0x78] sm:$0xff]
    %v141 = vld [vmem:[%s1 + $0x80] sm:$0xff]
    %v142 = vld [vmem:[%s1 + $0x88] sm:$0xff]
    %v143 = vld [vmem:[%s1 + $0x90] sm:$0xff]
    %v144 = vld [vmem:[%s1 + $0x98] sm:$0xff]
    %v145 = vld [vmem:[%s1 + $0xa0] sm:$0xff]
    %v146 = vld [vmem:[%s1 + $0xa8] sm:$0xff]
    %v147 = vld [vmem:[%s1 + $0xb0] sm:$0xff]
    %v148 = vld [vmem:[%s1 + $0xb8] sm:$0xff]
    %v149 = vld [vmem:[%s1 + $0xc0] sm:$0xff]
    %v150 = vld [vmem:[%s1 + $0xc8] sm:$0xff]
    %v151 = vld [vmem:[%s1 + $0xd0] sm:$0xff]
    %v152 = vld [vmem:[%s1 + $0xd8] sm:$0xff]
    %v153 = vld [vmem:[%s1 + $0xe0] sm:$0xff]
    %v154 = vld [vmem:[%s1 + $0xe8] sm:$0xff]
    %v155 = vld [vmem:[%s1 + $0xf0] sm:$0xff]
    %v156 = vld [vmem:[%s1 + $0xf8] sm:$0xff]
    %s157 = sld [smem:[#allocation2]]
    %s158 = smul.f32 %s124, %s157
    %v159 = vstv %s158
    %160 = vmatprep.subr.mxu0 0.0
    %161 = vmatpush1.msra.mxu0 %v125
    %162 = vmatprep.subr.mxu0 0.0
    %163 = vmatpush1.msra.mxu0 %v126
    %164 = vmatprep.subr.mxu0 0.0
    %165 = vmatpush1.msra.mxu0 %v127
    %166 = vmatprep.subr.mxu0 0.0
    %167 = vmatpush1.msra.mxu0 %v128
    %168 = vmatprep.subr.mxu0 0.0
    %169 = vmatpush1.msra.mxu0 %v129
    %170 = vmatprep.subr.mxu0 0.0
    %171 = vmatpush1.msra.mxu0 %v130
    %172 = vmatprep.subr.mxu0 0.0
    %173 = vmatpush1.msra.mxu0 %v131
    %174 = vmatprep.subr.mxu0 0.0
    %175 = vmatpush1.msra.mxu0 %v132
    %176 = vmatprep.subr.mxu0 0.0
    %177 = vmatpush1.msra.mxu0 %v133
    %178 = vmatprep.subr.mxu0 0.0
    %179 = vmatpush1.msra.mxu0 %v134
    %180 = vmatprep.subr.mxu0 0.0
    %181 = vmatpush1.msra.mxu0 %v135
    %182 = vmatprep.subr.mxu0 0.0
    %183 = vmatpush1.msra.mxu0 %v136
    %184 = vmatprep.subr.mxu0 0.0
    %185 = vmatpush1.msra.mxu0 %v137
    %186 = vmatprep.subr.mxu0 0.0
    %187 = vmatpush1.msra.mxu0 %v138
    %188 = vmatprep.subr.mxu0 0.0
    %189 = vmatpush1.msra.mxu0 %v139
    %190 = vmatprep.subr.mxu0 0.0
    %191 = vmatpush1.msra.mxu0 %v140
    %192 = vmatprep.subr.mxu0 0.0
    %193 = vmatpush1.msra.mxu0 %v141
    %194 = vmatprep.subr.mxu0 0.0
    %195 = vmatpush1.msra.mxu0 %v142
    %196 = vmatprep.subr.mxu0 0.0
    %197 = vmatpush1.msra.mxu0 %v143
    %198 = vmatprep.subr.mxu0 0.0
    %199 = vmatpush1.msra.mxu0 %v144
    %200 = vmatprep.subr.mxu0 0.0
    %201 = vmatpush1.msra.mxu0 %v145
    %202 = vmatprep.subr.mxu0 0.0
    %203 = vmatpush1.msra.mxu0 %v146
    %204 = vmatprep.subr.mxu0 0.0
    %205 = vmatpush1.msra.mxu0 %v147
    %206 = vmatprep.subr.mxu0 0.0
    %207 = vmatpush1.msra.mxu0 %v148
    %208 = vmatprep.subr.mxu0 0.0
    %209 = vmatpush1.msra.mxu0 %v149
    %210 = vmatprep.subr.mxu0 0.0
    %211 = vmatpush1.msra.mxu0 %v150
    %212 = vmatprep.subr.mxu0 0.0
    %213 = vmatpush1.msra.mxu0 %v151
    %214 = vmatprep.subr.mxu0 0.0
    %215 = vmatpush1.msra.mxu0 %v152
    %216 = vmatprep.subr.mxu0 0.0
    %217 = vmatpush1.msra.mxu0 %v153
    %218 = vmatprep.subr.mxu0 0.0
    %219 = vmatpush1.msra.mxu0 %v154
    %220 = vmatprep.subr.mxu0 0.0
    %221 = vmatpush1.msra.mxu0 %v155
    %222 = vmatprep.subr.mxu0 0.0
    %223 = vmatpush1.msra.mxu0 %v156
    %224 = vmatprep.mubr.f32.mxu0 %v36
    %225 = vmatmul.mubr.f32.gmra.mrb[0].mxu0 %v35
    %v226 = vpop.f32.mrb[0].mxu0
    %v227 = vadd.f32 %v159, %v226
    %v228 = vpop.f32.mrb[0].mxu0
    %229 = vdwg.mxu0
    %s230 = sld [smem:[#allocation2 + $0x1]]
    %v231 = vstv %s230
    %v232 = vadd.f32 %v227, %v231
    %vm233 = vcmask 1024
    %234 = vst.msk [vmem:[%s3] sm:$0x3] %vm233, %v232
    // Predicated region
    $region18: #{_lambda_.5} parent=1 // pred_check
      _
    $region19: #{_lambda_.5} parent=1 // pred_check_branch
      %236 = sbr.rel (0) target = $region21
    $region20: #{_lambda_.5} parent=1 // pred_region
      _
    $region21: #{_lambda_.5} parent=1 // pred_fallthru
      _
    // Predicated region
    $region22: #{_lambda_.5} parent=1 // pred_check
      _
    $region23: #{_lambda_.5} parent=1 // pred_check_branch
      %238 = sbr.rel (0) target = $region25
    $region24: #{_lambda_.5} parent=1 // pred_region
      _
    $region25: #{_lambda_.5} parent=1 // pred_fallthru
      _
    %239 = vsyncpa [#allocation3], 1

</llo_original>
